<compile_context>
chip_gen: v7x
topology: tpu7x:2x2x1
jax: 0.10.0
libtpu: 0.0.40
codegen_flags: <defaults>
</compile_context>

<pallas_src>
import numpy as np
import jax
import jax.numpy as jnp
from jax.experimental import pallas as pl
from jax.experimental.pallas import tpu as pltpu


def _align8(n):
    return ((n + 7) // 8) * 8


def _slab_layout(I, O, H, W):
    """Row offsets + shapes for every parameter block inside the packed weight slab."""
    entries = [
        ("w_in",   (I, H)),
        ("b_in",   (1, H)),
        ("w_attn", (2 * H, W)),
        ("b_attn", (1, W)),
        ("w_comb", (2 * H, H)),
        ("b_comb", (1, H)),
        ("w_ih",   (H, 4 * H)),   # gate order (i, f, o, g), (in, out) layout
        ("w_hh",   (H, 4 * H)),
        ("b_lstm", (1, 4 * H)),   # b_ih + b_hh, reordered to (i, f, o, g)
        ("w_dec",  (H, O)),
        ("b_dec",  (1, O)),
    ]
    layout, row = {}, 0
    for name, shape in entries:
        layout[name] = (row, shape)
        row += _align8(shape[0])
    lanes = ((max(4 * H, H, W, O, I) + 127) // 128) * 128
    return layout, _align8(row), lanes


def init_params(key, I, O, H, W):
    """Deterministic PyTorch-style init; returns (raw torch-layout, packed slab, slab layout)."""
    def uni(k, shape, fan_in):
        bound = 1.0 / np.sqrt(fan_in)
        return jax.random.uniform(k, shape, jnp.float32, -bound, bound)

    ks = jax.random.split(key, 12)
    raw = dict(
        W_in=uni(ks[0], (H, I), I),           b_in=uni(ks[1], (H,), I),
        W_attn=uni(ks[2], (W, 2 * H), 2 * H), b_attn=uni(ks[3], (W,), 2 * H),
        W_comb=uni(ks[4], (H, 2 * H), 2 * H), b_comb=uni(ks[5], (H,), 2 * H),
        W_ih=uni(ks[6], (4 * H, H), H),       W_hh=uni(ks[7], (4 * H, H), H),
        b_ih=uni(ks[8], (4 * H,), H),         b_hh=uni(ks[9], (4 * H,), H),
        W_dec=uni(ks[10], (O, H), H),         b_dec=uni(ks[11], (O,), H),
    )

    # PyTorch packs gates (i, f, g, o); the kernel wants (i, f, o, g) so a single sigmoid
    # covers gates[:, :3H] and a single tanh covers gates[:, 3H:].
    perm = np.concatenate([np.arange(0, H), np.arange(H, 2 * H),
                           np.arange(3 * H, 4 * H), np.arange(2 * H, 3 * H)])

    packed = dict(
        w_in=np.asarray(raw["W_in"]).T,
        b_in=np.asarray(raw["b_in"])[None],
        w_attn=np.asarray(raw["W_attn"]).T,     # rows 0:H = embed part, H:2H = attn_hidden
        b_attn=np.asarray(raw["b_attn"])[None],
        w_comb=np.asarray(raw["W_comb"]).T,     # rows 0:H = embed part, H:2H = attn_applied
        b_comb=np.asarray(raw["b_comb"])[None],
        w_ih=np.asarray(raw["W_ih"])[perm].T,   # (H, 4H) in (i, f, o, g) order
        w_hh=np.asarray(raw["W_hh"])[perm].T,
        b_lstm=(np.asarray(raw["b_ih"]) + np.asarray(raw["b_hh"]))[perm][None],
        w_dec=np.asarray(raw["W_dec"]).T,
        b_dec=np.asarray(raw["b_dec"])[None],
    )

    layout, rows, lanes = _slab_layout(I, O, H, W)
    slab = np.zeros((rows, lanes), np.float32)
    for name, (row, (r, c)) in layout.items():
        slab[row:row + r, :c] = packed[name]
    return raw, jnp.asarray(slab), layout


def attention_decoder_forward(slab, layout, dims, x, attn_hidden, hidden, enc_outs):
    """x: (1,B,I)  attn_hidden: (B,H)  hidden: ((1,1,H),(1,1,H))  enc_outs: (W,H)."""
    I, O, H, W = dims
    B = x.shape[1]
    h0, c0 = hidden
    f32 = jnp.float32

    def block(ref, name):
        row, (r, c) = layout[name]
        return ref[row:row + r, :c]

    def kernel(x_ref, ah_ref, h0_ref, c0_ref, enc_ref, slab_ref,
               out_ref, hn_ref, cn_ref, attn_w_ref):
        # ---- embed = in2hid(input) ----
        embed = (jnp.dot(x_ref[...], block(slab_ref, "w_in"),
                         preferred_element_type=f32) + block(slab_ref, "b_in"))

        # ---- attn(cat(embed, attn_hidden)); softmax over window (fused K=2H matmul) ----
        cat_eh = jnp.concatenate([embed, ah_ref[...]], axis=1)             # (B, 2H)
        logits = (jnp.dot(cat_eh, block(slab_ref, "w_attn"),
                          preferred_element_type=f32) + block(slab_ref, "b_attn"))
        e = jnp.exp(logits - jnp.max(logits, axis=1, keepdims=True))
        attn_w = e * pl.reciprocal(jnp.sum(e, axis=1, keepdims=True), approx=True)
        attn_w_ref[...] = attn_w

        # ---- attn_applied = bmm(attn_weights, enc_outs) ----
        applied = jnp.dot(attn_w, enc_ref[...], preferred_element_type=f32)

        # ---- attn_combine(cat(embed, attn_applied)) + ReLU (fused K=2H matmul) ----
        cat_ea = jnp.concatenate([embed, applied], axis=1)                 # (B, 2H)
        comb = jnp.maximum(
            jnp.dot(cat_ea, block(slab_ref, "w_comb"),
                    preferred_element_type=f32) + block(slab_ref, "b_comb"), 0.0)

        # ---- LSTM: input path of all four gates hoisted out of the recurrence ----
        x_gates = (jnp.dot(comb, block(slab_ref, "w_ih"),
                           preferred_element_type=f32) + block(slab_ref, "b_lstm"))  # (B, 4H)
        w_hh = block(slab_ref, "w_hh")                                     # (H, 4H)

        # ---- single-layer unidirectional LSTM over the "sequence" axis (len=B), unrolled ----
        h = h0_ref[...]                                                    # (1, H)
        c = c0_ref[...]
        h_rows = []
        for t in range(B):                                                 # static trip count
            gates = x_gates[t:t + 1, :] + jnp.dot(h, w_hh, preferred_element_type=f32)
            sig = jax.nn.sigmoid(gates[:, :3 * H])                         # i, f, o together
            i_g, f_g, o_g = sig[:, :H], sig[:, H:2 * H], sig[:, 2 * H:3 * H]
            g_g = jnp.tanh(gates[:, 3 * H:])
            c = f_g * c + i_g * g_g
            h = o_g * jnp.tanh(c)
            h_rows.append(h)
        hn_ref[...] = h
        cn_ref[...] = c
        seq = jnp.concatenate(h_rows, axis=0)                              # (B, H)

        # ---- dec_linear + softmax(dim=2) ----
        dec = (jnp.dot(seq, block(slab_ref, "w_dec"),
                       preferred_element_type=f32) + block(slab_ref, "b_dec"))
        de = jnp.exp(dec - jnp.max(dec, axis=1, keepdims=True))
        out_ref[...] = de * pl.reciprocal(jnp.sum(de, axis=1, keepdims=True), approx=True)

    vmem = pl.BlockSpec(memory_space=pltpu.MemorySpace.VMEM)
    out, hn, cn, attn_w = pl.pallas_call(
        kernel,
        out_shape=(
            jax.ShapeDtypeStruct((B, O), jnp.float32),
            jax.ShapeDtypeStruct((1, H), jnp.float32),
            jax.ShapeDtypeStruct((1, H), jnp.float32),
            jax.ShapeDtypeStruct((B, W), jnp.float32),
        ),
        in_specs=[vmem] * 6,
        out_specs=(vmem, vmem, vmem, vmem),
    )(x[0], attn_hidden, h0[0], c0[0], enc_outs, slab)

    output = out[None]                 # (1, B, OUTPUT_SIZE)
    hidden_out = (hn[None], cn[None])  # ((1,1,H), (1,1,H))
    return output, hidden_out, attn_w


def torch_style_reference(raw, x, attn_hidden, hidden, enc_outs):
    """Pure-JAX emulation of the PyTorch forward (for verification)."""
    H = raw["W_in"].shape[0]
    embed = x @ raw["W_in"].T + raw["b_in"]
    e0 = embed[0]
    logits = jnp.concatenate([e0, attn_hidden], axis=1) @ raw["W_attn"].T + raw["b_attn"]
    aw = jax.nn.softmax(logits, axis=1)
    applied = aw @ enc_outs
    comb = jnp.concatenate([e0, applied], axis=1) @ raw["W_comb"].T + raw["b_comb"]
    comb = jax.nn.relu(comb)
    h, c = hidden[0][0], hidden[1][0]
    outs = []
    for t in range(comb.shape[0]):
        x_t = comb[t:t + 1]
        gates = x_t @ raw["W_ih"].T + raw["b_ih"] + h @ raw["W_hh"].T + raw["b_hh"]
        i = jax.nn.sigmoid(gates[:, :H])
        f = jax.nn.sigmoid(gates[:, H:2 * H])
        g = jnp.tanh(gates[:, 2 * H:3 * H])
        o = jax.nn.sigmoid(gates[:, 3 * H:])
        c = f * c + i * g
        h = o * jnp.tanh(c)
        outs.append(h)
    seq = jnp.concatenate(outs, axis=0)
    dec = seq @ raw["W_dec"].T + raw["b_dec"]
    out = jax.nn.softmax(dec, axis=1)[None]
    return out, (h[None], c[None]), aw


if __name__ == "__main__":
    INPUT_SIZE, OUTPUT_SIZE, HIDDEN_SIZE = 16, 8, 32
    HIDDEN_LAYER, MINI_BATCH, WINDOW_SIZE, BIDIR = 1, 4, 8, False

    key = jax.random.PRNGKey(0)
    kp, kx, ka, ke = jax.random.split(key, 4)

    raw, slab, layout = init_params(kp, INPUT_SIZE, OUTPUT_SIZE, HIDDEN_SIZE, WINDOW_SIZE)
    dims = (INPUT_SIZE, OUTPUT_SIZE, HIDDEN_SIZE, WINDOW_SIZE)

    x = jax.random.normal(kx, (1, MINI_BATCH, INPUT_SIZE), jnp.float32)
    attn_hidden = jax.random.normal(ka, (MINI_BATCH, HIDDEN_SIZE), jnp.float32)
    enc_outs = jax.random.normal(ke, (WINDOW_SIZE, HIDDEN_SIZE), jnp.float32)
    # LSTM input is (1, B, H) with batch_first=True -> batch dim is 1.
    h0 = jnp.zeros((HIDDEN_LAYER, 1, HIDDEN_SIZE), jnp.float32)
    c0 = jnp.zeros((HIDDEN_LAYER, 1, HIDDEN_SIZE), jnp.float32)

    out, (hn, cn), attn_w = attention_decoder_forward(
        slab, layout, dims, x, attn_hidden, (h0, c0), enc_outs)
    jax.block_until_ready(out)

    # Sanity check against a pure-JAX emulation of the PyTorch forward.
    # (Tolerance accounts for pl.reciprocal(approx=True) in the two softmaxes.)
    ref_out, (ref_hn, ref_cn), ref_aw = torch_style_reference(
        raw, x, attn_hidden, (h0, c0), enc_outs)
    assert np.allclose(np.asarray(out), np.asarray(ref_out), rtol=5e-3, atol=5e-3)
    assert np.allclose(np.asarray(hn), np.asarray(ref_hn), rtol=5e-3, atol=5e-3)
    assert np.allclose(np.asarray(cn), np.asarray(ref_cn), rtol=5e-3, atol=5e-3)
    assert np.allclose(np.asarray(attn_w), np.asarray(ref_aw), rtol=5e-3, atol=5e-3)

    print("KERNEL_OK")
</pallas_src>

<mosaic_0001>
module attributes {stable_mosaic.version = 11 : i64} {
  func.func @kernel(%arg0: memref<4x16xf32, #tpu.memory_space<vmem>>, %arg1: memref<4x32xf32, #tpu.memory_space<vmem>>, %arg2: memref<1x32xf32, #tpu.memory_space<vmem>>, %arg3: memref<1x32xf32, #tpu.memory_space<vmem>>, %arg4: memref<8x32xf32, #tpu.memory_space<vmem>>, %arg5: memref<280x128xf32, #tpu.memory_space<vmem>>, %arg6: memref<4x8xf32, #tpu.memory_space<vmem>>, %arg7: memref<1x32xf32, #tpu.memory_space<vmem>>, %arg8: memref<1x32xf32, #tpu.memory_space<vmem>>, %arg9: memref<4x8xf32, #tpu.memory_space<vmem>>) attributes {dimension_semantics = [], scalar_prefetch = 0 : i64, scratch_operands = 0 : i64, tpu.core_type = #tpu.core_type<tc>} {
    %c0 = arith.constant 0 : index
    %c0_0 = arith.constant 0 : index
    %0 = vector.load %arg0[%c0, %c0_0] : memref<4x16xf32, #tpu.memory_space<vmem>>, vector<4x16xf32>
    %c0_1 = arith.constant 0 : index
    %c0_2 = arith.constant 0 : index
    %1 = vector.load %arg5[%c0_1, %c0_2] : memref<280x128xf32, #tpu.memory_space<vmem>>, vector<16x32xf32>
    %cst = arith.constant dense<0.000000e+00> : vector<4x32xf32>
    %2 = tpu.matmul %0, %1, %cst {dimension_numbers = #tpu.dot_dimension_numbers<[1], [0], [0], [1], [0, 0, 1, 1], [], []>} : vector<4x16xf32>, vector<16x32xf32>, vector<4x32xf32> -> vector<4x32xf32>
    %c16 = arith.constant 16 : index
    %c0_3 = arith.constant 0 : index
    %3 = vector.load %arg5[%c16, %c0_3] : memref<280x128xf32, #tpu.memory_space<vmem>>, vector<1x32xf32>
    %4 = vector.broadcast %3 : vector<1x32xf32> to vector<4x32xf32>
    %5 = arith.addf %2, %4 : vector<4x32xf32>
    %c0_4 = arith.constant 0 : index
    %c0_5 = arith.constant 0 : index
    %6 = vector.load %arg1[%c0_4, %c0_5] : memref<4x32xf32, #tpu.memory_space<vmem>>, vector<4x32xf32>
    %7 = tpu.concatenate %5, %6 in 1 : vector<4x32xf32>, vector<4x32xf32> -> vector<4x64xf32>
    %c24 = arith.constant 24 : index
    %c0_6 = arith.constant 0 : index
    %8 = vector.load %arg5[%c24, %c0_6] : memref<280x128xf32, #tpu.memory_space<vmem>>, vector<64x8xf32>
    %cst_7 = arith.constant dense<0.000000e+00> : vector<4x8xf32>
    %9 = tpu.matmul %7, %8, %cst_7 {dimension_numbers = #tpu.dot_dimension_numbers<[1], [0], [0], [1], [0, 0, 1, 1], [], []>} : vector<4x64xf32>, vector<64x8xf32>, vector<4x8xf32> -> vector<4x8xf32>
    %c88 = arith.constant 88 : index
    %c0_8 = arith.constant 0 : index
    %10 = vector.load %arg5[%c88, %c0_8] : memref<280x128xf32, #tpu.memory_space<vmem>>, vector<1x8xf32>
    %11 = vector.broadcast %10 : vector<1x8xf32> to vector<4x8xf32>
    %12 = arith.addf %9, %11 : vector<4x8xf32>
    %cst_9 = arith.constant dense<0xFF800000> : vector<4xf32>
    %13 = vector.multi_reduction <maximumf>, %12, %cst_9 [1] : vector<4x8xf32> to vector<4xf32>
    %14 = vector.shape_cast %13 : vector<4xf32> to vector<4x1xf32>
    %15 = vector.broadcast %14 : vector<4x1xf32> to vector<4x8xf32>
    %16 = arith.subf %12, %15 : vector<4x8xf32>
    %17 = math.exp %16 : vector<4x8xf32>
    %cst_10 = arith.constant dense<0.000000e+00> : vector<4xf32>
    %18 = vector.multi_reduction <add>, %17, %cst_10 [1] : vector<4x8xf32> to vector<4xf32>
    %19 = vector.shape_cast %18 : vector<4xf32> to vector<4x1xf32>
    %20 = tpu.reciprocal %19 {approx = true} : vector<4x1xf32> -> vector<4x1xf32>
    %21 = vector.broadcast %20 : vector<4x1xf32> to vector<4x8xf32>
    %22 = arith.mulf %17, %21 : vector<4x8xf32>
    %c0_11 = arith.constant 0 : index
    %c0_12 = arith.constant 0 : index
    %23 = vector.load %arg9[%c0_11, %c0_12] : memref<4x8xf32, #tpu.memory_space<vmem>>, vector<4x8xf32>
    tpu.vector_store %arg9[%c0_11, %c0_12], %22 {strides = array<i32>} : memref<4x8xf32, #tpu.memory_space<vmem>>, vector<4x8xf32>,
    %c0_13 = arith.constant 0 : index
    %c0_14 = arith.constant 0 : index
    %24 = vector.load %arg4[%c0_13, %c0_14] : memref<8x32xf32, #tpu.memory_space<vmem>>, vector<8x32xf32>
    %cst_15 = arith.constant dense<0.000000e+00> : vector<4x32xf32>
    %25 = tpu.matmul %22, %24, %cst_15 {dimension_numbers = #tpu.dot_dimension_numbers<[1], [0], [0], [1], [0, 0, 1, 1], [], []>} : vector<4x8xf32>, vector<8x32xf32>, vector<4x32xf32> -> vector<4x32xf32>
    %26 = tpu.concatenate %5, %25 in 1 : vector<4x32xf32>, vector<4x32xf32> -> vector<4x64xf32>
    %c96 = arith.constant 96 : index
    %c0_16 = arith.constant 0 : index
    %27 = vector.load %arg5[%c96, %c0_16] : memref<280x128xf32, #tpu.memory_space<vmem>>, vector<64x32xf32>
    %cst_17 = arith.constant dense<0.000000e+00> : vector<4x32xf32>
    %28 = tpu.matmul %26, %27, %cst_17 {dimension_numbers = #tpu.dot_dimension_numbers<[1], [0], [0], [1], [0, 0, 1, 1], [], []>} : vector<4x64xf32>, vector<64x32xf32>, vector<4x32xf32> -> vector<4x32xf32>
    %c160 = arith.constant 160 : index
    %c0_18 = arith.constant 0 : index
    %29 = vector.load %arg5[%c160, %c0_18] : memref<280x128xf32, #tpu.memory_space<vmem>>, vector<1x32xf32>
    %30 = vector.broadcast %29 : vector<1x32xf32> to vector<4x32xf32>
    %31 = arith.addf %28, %30 : vector<4x32xf32>
    %cst_19 = arith.constant 0.000000e+00 : f32
    %32 = vector.broadcast %cst_19 : f32 to vector<4x32xf32>
    %33 = arith.maximumf %31, %32 : vector<4x32xf32>
    %c168 = arith.constant 168 : index
    %c0_20 = arith.constant 0 : index
    %34 = vector.load %arg5[%c168, %c0_20] : memref<280x128xf32, #tpu.memory_space<vmem>>, vector<32x128xf32>
    %cst_21 = arith.constant dense<0.000000e+00> : vector<4x128xf32>
    %35 = tpu.matmul %33, %34, %cst_21 {dimension_numbers = #tpu.dot_dimension_numbers<[1], [0], [0], [1], [0, 0, 1, 1], [], []>} : vector<4x32xf32>, vector<32x128xf32>, vector<4x128xf32> -> vector<4x128xf32>
    %c232 = arith.constant 232 : index
    %c0_22 = arith.constant 0 : index
    %36 = vector.load %arg5[%c232, %c0_22] : memref<280x128xf32, #tpu.memory_space<vmem>>, vector<1x128xf32>
    %37 = vector.broadcast %36 : vector<1x128xf32> to vector<4x128xf32>
    %38 = arith.addf %35, %37 : vector<4x128xf32>
    %c200 = arith.constant 200 : index
    %c0_23 = arith.constant 0 : index
    %39 = vector.load %arg5[%c200, %c0_23] : memref<280x128xf32, #tpu.memory_space<vmem>>, vector<32x128xf32>
    %c0_24 = arith.constant 0 : index
    %c0_25 = arith.constant 0 : index
    %40 = vector.load %arg2[%c0_24, %c0_25] : memref<1x32xf32, #tpu.memory_space<vmem>>, vector<1x32xf32>
    %c0_26 = arith.constant 0 : index
    %c0_27 = arith.constant 0 : index
    %41 = vector.load %arg3[%c0_26, %c0_27] : memref<1x32xf32, #tpu.memory_space<vmem>>, vector<1x32xf32>
    %42 = vector.extract_strided_slice %38 {offsets = [0, 0], sizes = [1, 128], strides = [1, 1]} : vector<4x128xf32> to vector<1x128xf32>
    %cst_28 = arith.constant dense<0.000000e+00> : vector<1x128xf32>
    %43 = tpu.matmul %40, %39, %cst_28 {dimension_numbers = #tpu.dot_dimension_numbers<[1], [0], [0], [1], [0, 0, 1, 1], [], []>} : vector<1x32xf32>, vector<32x128xf32>, vector<1x128xf32> -> vector<1x128xf32>
    %44 = arith.addf %42, %43 : vector<1x128xf32>
    %45 = vector.extract_strided_slice %44 {offsets = [0, 0], sizes = [1, 96], strides = [1, 1]} : vector<1x128xf32> to vector<1x96xf32>
    %46 = arith.negf %45 : vector<1x96xf32>
    %47 = math.exp %46 : vector<1x96xf32>
    %cst_29 = arith.constant 1.000000e+00 : f32
    %48 = vector.broadcast %cst_29 : f32 to vector<1x96xf32>
    %49 = arith.addf %48, %47 : vector<1x96xf32>
    %50 = arith.divf %48, %49 : vector<1x96xf32>
    %51 = vector.extract_strided_slice %50 {offsets = [0, 0], sizes = [1, 32], strides = [1, 1]} : vector<1x96xf32> to vector<1x32xf32>
    %52 = vector.extract_strided_slice %50 {offsets = [0, 32], sizes = [1, 32], strides = [1, 1]} : vector<1x96xf32> to vector<1x32xf32>
    %53 = vector.extract_strided_slice %50 {offsets = [0, 64], sizes = [1, 32], strides = [1, 1]} : vector<1x96xf32> to vector<1x32xf32>
    %54 = vector.extract_strided_slice %44 {offsets = [0, 96], sizes = [1, 32], strides = [1, 1]} : vector<1x128xf32> to vector<1x32xf32>
    %55 = math.tanh %54 : vector<1x32xf32>
    %56 = arith.mulf %52, %41 : vector<1x32xf32>
    %57 = arith.mulf %51, %55 : vector<1x32xf32>
    %58 = arith.addf %56, %57 : vector<1x32xf32>
    %59 = math.tanh %58 : vector<1x32xf32>
    %60 = arith.mulf %53, %59 : vector<1x32xf32>
    %61 = vector.extract_strided_slice %38 {offsets = [1, 0], sizes = [1, 128], strides = [1, 1]} : vector<4x128xf32> to vector<1x128xf32>
    %cst_30 = arith.constant dense<0.000000e+00> : vector<1x128xf32>
    %62 = tpu.matmul %60, %39, %cst_30 {dimension_numbers = #tpu.dot_dimension_numbers<[1], [0], [0], [1], [0, 0, 1, 1], [], []>} : vector<1x32xf32>, vector<32x128xf32>, vector<1x128xf32> -> vector<1x128xf32>
    %63 = arith.addf %61, %62 : vector<1x128xf32>
    %64 = vector.extract_strided_slice %63 {offsets = [0, 0], sizes = [1, 96], strides = [1, 1]} : vector<1x128xf32> to vector<1x96xf32>
    %65 = arith.negf %64 : vector<1x96xf32>
    %66 = math.exp %65 : vector<1x96xf32>
    %cst_31 = arith.constant 1.000000e+00 : f32
    %67 = vector.broadcast %cst_31 : f32 to vector<1x96xf32>
    %68 = arith.addf %67, %66 : vector<1x96xf32>
    %69 = arith.divf %67, %68 : vector<1x96xf32>
    %70 = vector.extract_strided_slice %69 {offsets = [0, 0], sizes = [1, 32], strides = [1, 1]} : vector<1x96xf32> to vector<1x32xf32>
    %71 = vector.extract_strided_slice %69 {offsets = [0, 32], sizes = [1, 32], strides = [1, 1]} : vector<1x96xf32> to vector<1x32xf32>
    %72 = vector.extract_strided_slice %69 {offsets = [0, 64], sizes = [1, 32], strides = [1, 1]} : vector<1x96xf32> to vector<1x32xf32>
    %73 = vector.extract_strided_slice %63 {offsets = [0, 96], sizes = [1, 32], strides = [1, 1]} : vector<1x128xf32> to vector<1x32xf32>
    %74 = math.tanh %73 : vector<1x32xf32>
    %75 = arith.mulf %71, %58 : vector<1x32xf32>
    %76 = arith.mulf %70, %74 : vector<1x32xf32>
    %77 = arith.addf %75, %76 : vector<1x32xf32>
    %78 = math.tanh %77 : vector<1x32xf32>
    %79 = arith.mulf %72, %78 : vector<1x32xf32>
    %80 = vector.extract_strided_slice %38 {offsets = [2, 0], sizes = [1, 128], strides = [1, 1]} : vector<4x128xf32> to vector<1x128xf32>
    %cst_32 = arith.constant dense<0.000000e+00> : vector<1x128xf32>
    %81 = tpu.matmul %79, %39, %cst_32 {dimension_numbers = #tpu.dot_dimension_numbers<[1], [0], [0], [1], [0, 0, 1, 1], [], []>} : vector<1x32xf32>, vector<32x128xf32>, vector<1x128xf32> -> vector<1x128xf32>
    %82 = arith.addf %80, %81 : vector<1x128xf32>
    %83 = vector.extract_strided_slice %82 {offsets = [0, 0], sizes = [1, 96], strides = [1, 1]} : vector<1x128xf32> to vector<1x96xf32>
    %84 = arith.negf %83 : vector<1x96xf32>
    %85 = math.exp %84 : vector<1x96xf32>
    %cst_33 = arith.constant 1.000000e+00 : f32
    %86 = vector.broadcast %cst_33 : f32 to vector<1x96xf32>
    %87 = arith.addf %86, %85 : vector<1x96xf32>
    %88 = arith.divf %86, %87 : vector<1x96xf32>
    %89 = vector.extract_strided_slice %88 {offsets = [0, 0], sizes = [1, 32], strides = [1, 1]} : vector<1x96xf32> to vector<1x32xf32>
    %90 = vector.extract_strided_slice %88 {offsets = [0, 32], sizes = [1, 32], strides = [1, 1]} : vector<1x96xf32> to vector<1x32xf32>
    %91 = vector.extract_strided_slice %88 {offsets = [0, 64], sizes = [1, 32], strides = [1, 1]} : vector<1x96xf32> to vector<1x32xf32>
    %92 = vector.extract_strided_slice %82 {offsets = [0, 96], sizes = [1, 32], strides = [1, 1]} : vector<1x128xf32> to vector<1x32xf32>
    %93 = math.tanh %92 : vector<1x32xf32>
    %94 = arith.mulf %90, %77 : vector<1x32xf32>
    %95 = arith.mulf %89, %93 : vector<1x32xf32>
    %96 = arith.addf %94, %95 : vector<1x32xf32>
    %97 = math.tanh %96 : vector<1x32xf32>
    %98 = arith.mulf %91, %97 : vector<1x32xf32>
    %99 = vector.extract_strided_slice %38 {offsets = [3, 0], sizes = [1, 128], strides = [1, 1]} : vector<4x128xf32> to vector<1x128xf32>
    %cst_34 = arith.constant dense<0.000000e+00> : vector<1x128xf32>
    %100 = tpu.matmul %98, %39, %cst_34 {dimension_numbers = #tpu.dot_dimension_numbers<[1], [0], [0], [1], [0, 0, 1, 1], [], []>} : vector<1x32xf32>, vector<32x128xf32>, vector<1x128xf32> -> vector<1x128xf32>
    %101 = arith.addf %99, %100 : vector<1x128xf32>
    %102 = vector.extract_strided_slice %101 {offsets = [0, 0], sizes = [1, 96], strides = [1, 1]} : vector<1x128xf32> to vector<1x96xf32>
    %103 = arith.negf %102 : vector<1x96xf32>
    %104 = math.exp %103 : vector<1x96xf32>
    %cst_35 = arith.constant 1.000000e+00 : f32
    %105 = vector.broadcast %cst_35 : f32 to vector<1x96xf32>
    %106 = arith.addf %105, %104 : vector<1x96xf32>
    %107 = arith.divf %105, %106 : vector<1x96xf32>
    %108 = vector.extract_strided_slice %107 {offsets = [0, 0], sizes = [1, 32], strides = [1, 1]} : vector<1x96xf32> to vector<1x32xf32>
    %109 = vector.extract_strided_slice %107 {offsets = [0, 32], sizes = [1, 32], strides = [1, 1]} : vector<1x96xf32> to vector<1x32xf32>
    %110 = vector.extract_strided_slice %107 {offsets = [0, 64], sizes = [1, 32], strides = [1, 1]} : vector<1x96xf32> to vector<1x32xf32>
    %111 = vector.extract_strided_slice %101 {offsets = [0, 96], sizes = [1, 32], strides = [1, 1]} : vector<1x128xf32> to vector<1x32xf32>
    %112 = math.tanh %111 : vector<1x32xf32>
    %113 = arith.mulf %109, %96 : vector<1x32xf32>
    %114 = arith.mulf %108, %112 : vector<1x32xf32>
    %115 = arith.addf %113, %114 : vector<1x32xf32>
    %116 = math.tanh %115 : vector<1x32xf32>
    %117 = arith.mulf %110, %116 : vector<1x32xf32>
    %c0_36 = arith.constant 0 : index
    %c0_37 = arith.constant 0 : index
    %118 = vector.load %arg7[%c0_36, %c0_37] : memref<1x32xf32, #tpu.memory_space<vmem>>, vector<1x32xf32>
    tpu.vector_store %arg7[%c0_36, %c0_37], %117 {strides = array<i32>} : memref<1x32xf32, #tpu.memory_space<vmem>>, vector<1x32xf32>,
    %c0_38 = arith.constant 0 : index
    %c0_39 = arith.constant 0 : index
    %119 = vector.load %arg8[%c0_38, %c0_39] : memref<1x32xf32, #tpu.memory_space<vmem>>, vector<1x32xf32>
    tpu.vector_store %arg8[%c0_38, %c0_39], %115 {strides = array<i32>} : memref<1x32xf32, #tpu.memory_space<vmem>>, vector<1x32xf32>,
    %120 = tpu.concatenate %60, %79, %98, %117 in 0 : vector<1x32xf32>, vector<1x32xf32>, vector<1x32xf32>, vector<1x32xf32> -> vector<4x32xf32>
    %c240 = arith.constant 240 : index
    %c0_40 = arith.constant 0 : index
    %121 = vector.load %arg5[%c240, %c0_40] : memref<280x128xf32, #tpu.memory_space<vmem>>, vector<32x8xf32>
    %cst_41 = arith.constant dense<0.000000e+00> : vector<4x8xf32>
    %122 = tpu.matmul %120, %121, %cst_41 {dimension_numbers = #tpu.dot_dimension_numbers<[1], [0], [0], [1], [0, 0, 1, 1], [], []>} : vector<4x32xf32>, vector<32x8xf32>, vector<4x8xf32> -> vector<4x8xf32>
    %c272 = arith.constant 272 : index
    %c0_42 = arith.constant 0 : index
    %123 = vector.load %arg5[%c272, %c0_42] : memref<280x128xf32, #tpu.memory_space<vmem>>, vector<1x8xf32>
    %124 = vector.broadcast %123 : vector<1x8xf32> to vector<4x8xf32>
    %125 = arith.addf %122, %124 : vector<4x8xf32>
    %cst_43 = arith.constant dense<0xFF800000> : vector<4xf32>
    %126 = vector.multi_reduction <maximumf>, %125, %cst_43 [1] : vector<4x8xf32> to vector<4xf32>
    %127 = vector.shape_cast %126 : vector<4xf32> to vector<4x1xf32>
    %128 = vector.broadcast %127 : vector<4x1xf32> to vector<4x8xf32>
    %129 = arith.subf %125, %128 : vector<4x8xf32>
    %130 = math.exp %129 : vector<4x8xf32>
    %cst_44 = arith.constant dense<0.000000e+00> : vector<4xf32>
    %131 = vector.multi_reduction <add>, %130, %cst_44 [1] : vector<4x8xf32> to vector<4xf32>
    %132 = vector.shape_cast %131 : vector<4xf32> to vector<4x1xf32>
    %133 = tpu.reciprocal %132 {approx = true} : vector<4x1xf32> -> vector<4x1xf32>
    %134 = vector.broadcast %133 : vector<4x1xf32> to vector<4x8xf32>
    %135 = arith.mulf %130, %134 : vector<4x8xf32>
    %c0_45 = arith.constant 0 : index
    %c0_46 = arith.constant 0 : index
    %136 = vector.load %arg6[%c0_45, %c0_46] : memref<4x8xf32, #tpu.memory_space<vmem>>, vector<4x8xf32>
    tpu.vector_store %arg6[%c0_45, %c0_46], %135 {strides = array<i32>} : memref<4x8xf32, #tpu.memory_space<vmem>>, vector<4x8xf32>,
    return
  }
}

</mosaic_0001>

<llo_original>
// kernel: tpu_custom_call.1
$region0: #{tpu_custom_call.1}
  #allocation0 [shape = 'u32[]', space=smem, size = 0x4, offset = 0x4, fixed_abs, tag = 'smem constant byte address 0x4 - core index']
  #allocation1 [shape = 'u32[144,128]{1,0:T(1,128)}', space=vmem, size = 0x12000, scoped, tag = 'internal scratch']
  %s0 = inlined_call_operand.hbm [shape: f32[4,16], index: 0, kind: input, shape index: {}]
  %s1 = inlined_call_operand.hbm [shape: f32[4,32], index: 1, kind: input, shape index: {}]
  %s2 = inlined_call_operand.vmem [shape: f32[1,32], index: 2, kind: input, shape index: {}]
  %s3 = inlined_call_operand.vmem [shape: f32[1,32], index: 3, kind: input, shape index: {}]
  %s4 = inlined_call_operand.vmem [shape: f32[8,32], index: 4, kind: input, shape index: {}]
  %s5 = inlined_call_operand.hbm [shape: f32[280,128], index: 5, kind: input, shape index: {}]
  %s6 = inlined_call_operand.hbm [shape: f32[4,8], index: 6, kind: output, shape index: {0}]
  %s7 = inlined_call_operand.hbm [shape: f32[1,32], index: 7, kind: output, shape index: {1}]
  %s8 = inlined_call_operand.hbm [shape: f32[1,32], index: 8, kind: output, shape index: {2}]
  %s9 = inlined_call_operand.hbm [shape: f32[4,8], index: 9, kind: output, shape index: {3}]
  %10 = xla_tuple %s6, %s7, %s8, %s9
  %s11 = sld [smem:[#allocation0]]
  $region70: #{tpu_custom_call.1} parent=0
    _
  %s13 = ssub.s32 1, %s11
  %s14 = scalar_select 0, %s13, %s11
  $region1: #{tpu_custom_call.1} parent=0
    #allocation2 [shape = 'u8[2048]{0}', space=vmem, size = 0x800, scoped, tag = 'input window, operand 0, single buffered']
    #allocation3 [shape = 's32[1]{0}', space=sflag, size = 0x4, scoped, tag = 'scoped memory for tpu_custom_call.1']
    #allocation4 [shape = 's32[1]{0}', space=sflag, size = 0x4, scoped, tag = 'scoped memory for tpu_custom_call.1']
    #allocation5 [shape = 'u8[2048]{0}', space=vmem, size = 0x800, scoped, tag = 'input window, operand 1, single buffered']
    #allocation6 [shape = 's32[1]{0}', space=sflag, size = 0x4, scoped, tag = 'scoped memory for tpu_custom_call.1']
    #allocation7 [shape = 'u8[143360]{0}', space=vmem, size = 0x23000, scoped, tag = 'input window, operand 5, single buffered']
    #allocation8 [shape = 'u8[2048]{0}', space=vmem, size = 0x800, scoped, tag = 'output window, operand 0, single buffered']
    #allocation9 [shape = 'u8[512]{0}', space=vmem, size = 0x400, scoped, tag = 'output window, operand 1, single buffered']
    #allocation10 [shape = 's32[1]{0}', space=sflag, size = 0x4, scoped, tag = 'scoped memory for tpu_custom_call.1']
    #allocation11 [shape = 'u8[512]{0}', space=vmem, size = 0x400, scoped, tag = 'output window, operand 2, single buffered']
    #allocation12 [shape = 'u8[2048]{0}', space=vmem, size = 0x800, scoped, tag = 'output window, operand 3, single buffered']
    #allocation13 [shape = 's32[1]{0}', space=sflag, size = 0x4, scoped, tag = 'scoped memory for tpu_custom_call.1']
    %15 = vsyncpa [#allocation3], 0
    %16 = vsyncpa [#allocation6], 0
    %17 = vsyncpa [#allocation4], 0
    %18 = vsyncpa [#allocation10], 0
    %19 = vsyncpa [#allocation13], 0
    // Predicated region
    $region2: #{tpu_custom_call.1} parent=1 // pred_check
      _
    $region3: #{tpu_custom_call.1} parent=1 // pred_check_branch
      %21 = sbr.rel (0) target = $region5
    $region4: #{tpu_custom_call.1} parent=1 // pred_region
      %s23 = ssub.s32 64, 64
      %24 = vsyncadd [#allocation3], %s23
      %s26 = sshll.u32 [#allocation2], 4
      %s27 = int_to_ptr.vmem [resolvable:$true] %s26
      %29 = dma.hbm_to_vmem [thread:$0]  %s0, 64, %s27, [#allocation3]
    $region5: #{tpu_custom_call.1} parent=1 // pred_fallthru
      _
    // Predicated region
    $region6: #{tpu_custom_call.1} parent=1 // pred_check
      _
    $region7: #{tpu_custom_call.1} parent=1 // pred_check_branch
      %31 = sbr.rel (0) target = $region9
    $region8: #{tpu_custom_call.1} parent=1 // pred_region
      %s33 = ssub.s32 64, 64
      %34 = vsyncadd [#allocation6], %s33
      %s36 = sshll.u32 [#allocation5], 4
      %s37 = int_to_ptr.vmem [resolvable:$true] %s36
      %39 = dma.hbm_to_vmem [thread:$0]  %s1, 64, %s37, [#allocation6]
    $region9: #{tpu_custom_call.1} parent=1 // pred_fallthru
      _
    // Predicated region
    $region10: #{tpu_custom_call.1} parent=1 // pred_check
      _
    $region11: #{tpu_custom_call.1} parent=1 // pred_check_branch
      %41 = sbr.rel (0) target = $region13
    $region12: #{tpu_custom_call.1} parent=1 // pred_region
      _
    $region13: #{tpu_custom_call.1} parent=1 // pred_fallthru
      _
    // Predicated region
    $region14: #{tpu_custom_call.1} parent=1 // pred_check
      _
    $region15: #{tpu_custom_call.1} parent=1 // pred_check_branch
      %43 = sbr.rel (0) target = $region17
    $region16: #{tpu_custom_call.1} parent=1 // pred_region
      _
    $region17: #{tpu_custom_call.1} parent=1 // pred_fallthru
      _
    // Predicated region
    $region18: #{tpu_custom_call.1} parent=1 // pred_check
      _
    $region19: #{tpu_custom_call.1} parent=1 // pred_check_branch
      %45 = sbr.rel (0) target = $region21
    $region20: #{tpu_custom_call.1} parent=1 // pred_region
      _
    $region21: #{tpu_custom_call.1} parent=1 // pred_fallthru
      _
    // Predicated region
    $region22: #{tpu_custom_call.1} parent=1 // pred_check
      _
    $region23: #{tpu_custom_call.1} parent=1 // pred_check_branch
      %47 = sbr.rel (0) target = $region25
    $region24: #{tpu_custom_call.1} parent=1 // pred_region
      %s49 = ssub.s32 4480, 4480
      %50 = vsyncadd [#allocation6], %s49
      %s51 = sshll.u32 [#allocation7], 4
      %s52 = int_to_ptr.vmem [resolvable:$true] %s51
      %57 = dma.hbm_to_vmem [thread:$0]  %s5, 4480, %s52, [#allocation6], 128, 128, 8
    $region25: #{tpu_custom_call.1} parent=1 // pred_fallthru
      _
    // Predicated region
    $region26: #{tpu_custom_call.1} parent=1 // pred_check
      _
    $region27: #{tpu_custom_call.1} parent=1 // pred_check_branch
      %59 = sbr.rel (0) target = $region29
    $region28: #{tpu_custom_call.1} parent=1 // pred_region
      %60 = dma.done [#allocation3], 64
    $region29: #{tpu_custom_call.1} parent=1 // pred_fallthru
      _
    // Predicated region
    $region30: #{tpu_custom_call.1} parent=1 // pred_check
      _
    $region31: #{tpu_custom_call.1} parent=1 // pred_check_branch
      %62 = sbr.rel (0) target = $region33
    $region32: #{tpu_custom_call.1} parent=1 // pred_region
      %63 = dma.done [#allocation6], 64
    $region33: #{tpu_custom_call.1} parent=1 // pred_fallthru
      _
    // Predicated region
    $region34: #{tpu_custom_call.1} parent=1 // pred_check
      _
    $region35: #{tpu_custom_call.1} parent=1 // pred_check_branch
      %65 = sbr.rel (0) target = $region37
    $region36: #{tpu_custom_call.1} parent=1 // pred_region
      %66 = dma.done [#allocation6], 4480
    $region37: #{tpu_custom_call.1} parent=1 // pred_fallthru
      _
    %v67 = vld [vmem:[#allocation2] sm:$0xf]
    %v68 = vld [vmem:[#allocation7] sm:$0xff]
    %v69 = vld [vmem:[#allocation7 + $0x8] sm:$0xff]
    %v70 = vld [vmem:[#allocation7 + $0x10] sm:$0x1]
    %v71 = vlaneseq
    %v72 = vshrl.u32 %v71, 7
    %v73 = vsub.s32 0, %v72
    %v74 = vrot.slane %v70, %v73
    %vm75 = vcmask 130048
    %v77 = vsel %vm75, %v67, 0
    %79 = vmatprep.subr.mxu0 0.0
    %80 = vmatpush1.msra.mxu0 %v68
    %81 = vmatprep.subr.mxu0 0.0
    %82 = vmatpush1.msra.mxu0 %v69
    %83 = vmatprep.subr.mxu0 0.0
    %84 = vmatpush1.msra.mxu0 0.0
    %85 = vmatprep.subr.mxu0 0.0
    %86 = vmatpush1.msra.mxu0 0.0
    %87 = vmatprep.subr.mxu0 0.0
    %88 = vmatpush1.msra.mxu0 0.0
    %89 = vmatprep.subr.mxu0 0.0
    %90 = vmatpush1.msra.mxu0 0.0
    %91 = vmatprep.subr.mxu0 0.0
    %92 = vmatpush1.msra.mxu0 0.0
    %93 = vmatprep.subr.mxu0 0.0
    %94 = vmatpush1.msra.mxu0 0.0
    %95 = vmatprep.subr.mxu0 0.0
    %96 = vmatpush1.msra.mxu0 0.0
    %97 = vmatprep.subr.mxu0 0.0
    %98 = vmatpush1.msra.mxu0 0.0
    %99 = vmatprep.subr.mxu0 0.0
    %100 = vmatpush1.msra.mxu0 0.0
    %101 = vmatprep.subr.mxu0 0.0
    %102 = vmatpush1.msra.mxu0 0.0
    %103 = vmatprep.subr.mxu0 0.0
    %104 = vmatpush1.msra.mxu0 0.0
    %105 = vmatprep.subr.mxu0 0.0
    %106 = vmatpush1.msra.mxu0 0.0
    %107 = vmatprep.subr.mxu0 0.0
    %108 = vmatpush1.msra.mxu0 0.0
    %109 = vmatprep.subr.mxu0 0.0
    %110 = vmatpush1.msra.mxu0 0.0
    %111 = vmatprep.subr.mxu0 0.0
    %112 = vmatpush1.msra.mxu0 0.0
    %113 = vmatprep.subr.mxu0 0.0
    %114 = vmatpush1.msra.mxu0 0.0
    %115 = vmatprep.subr.mxu0 0.0
    %116 = vmatpush1.msra.mxu0 0.0
    %117 = vmatprep.subr.mxu0 0.0
    %118 = vmatpush1.msra.mxu0 0.0
    %119 = vmatprep.subr.mxu0 0.0
    %120 = vmatpush1.msra.mxu0 0.0
    %121 = vmatprep.subr.mxu0 0.0
    %122 = vmatpush1.msra.mxu0 0.0
    %123 = vmatprep.subr.mxu0 0.0
    %124 = vmatpush1.msra.mxu0 0.0
    %125 = vmatprep.subr.mxu0 0.0
    %126 = vmatpush1.msra.mxu0 0.0
    %127 = vmatprep.subr.mxu0 0.0
    %128 = vmatpush1.msra.mxu0 0.0
    %129 = vmatprep.subr.mxu0 0.0
    %130 = vmatpush1.msra.mxu0 0.0
    %131 = vmatprep.subr.mxu0 0.0
    %132 = vmatpush1.msra.mxu0 0.0
    %133 = vmatprep.subr.mxu0 0.0
    %134 = vmatpush1.msra.mxu0 0.0
    %135 = vmatprep.subr.mxu0 0.0
    %136 = vmatpush1.msra.mxu0 0.0
    %137 = vmatprep.subr.mxu0 0.0
    %138 = vmatpush1.msra.mxu0 0.0
    %139 = vmatprep.subr.mxu0 0.0
    %140 = vmatpush1.msra.mxu0 0.0
    %141 = vmatprep.subr.mxu0 0.0
    %142 = vmatpush1.msra.mxu0 0.0
    %143 = vmatprep.mubr.f32.mxu0 0.0
    %144 = vmatmul.mubr.f32.gmra.mrb[0].mxu0 %v77
    %v145 = vpop.f32.mrb[0].mxu0
    %v146 = vadd.f32 %v74, %v145
    %v147 = vpop.f32.mrb[0].mxu0
    %148 = vdwg.mxu0
    %v149 = vld [vmem:[#allocation5] sm:$0xf]
    %151 = vrot.lane.b32.xlu0 %v149, 32
    %v152 = vpop.permute.xlu0 %151
    %vm154 = vcmask 261120
    %v155 = vsel %vm154, %v146, %v152
    %v156 = vld [vmem:[#allocation7 + $0x18] sm:$0xff]
    %v157 = vld [vmem:[#allocation7 + $0x20] sm:$0xff]
    %v158 = vld [vmem:[#allocation7 + $0x28] sm:$0xff]
    %v159 = vld [vmem:[#allocation7 + $0x30] sm:$0xff]
    %v160 = vld [vmem:[#allocation7 + $0x38] sm:$0xff]
    %v161 = vld [vmem:[#allocation7 + $0x40] sm:$0xff]
    %v162 = vld [vmem:[#allocation7 + $0x48] sm:$0xff]
    %v163 = vld [vmem:[#allocation7 + $0x50] sm:$0xff]
    %v164 = vld [vmem:[#allocation7 + $0x58] sm:$0x1]
    %v165 = vlaneseq
    %v166 = vshrl.u32 %v165, 7
    %v167 = vsub.s32 0, %v166
    %v168 = vrot.slane %v164, %v167
    %vm169 = vcmask 523264
    %v171 = vsel %vm169, %v155, 0
    %173 = vmatprep.subr.mxu0 0.0
    %174 = vmatpush1.msra.mxu0 %v156
    %175 = vmatprep.subr.mxu0 0.0
    %176 = vmatpush1.msra.mxu0 %v157
    %177 = vmatprep.subr.mxu0 0.0
    %178 = vmatpush1.msra.mxu0 %v158
    %179 = vmatprep.subr.mxu0 0.0
    %180 = vmatpush1.msra.mxu0 %v159
    %181 = vmatprep.subr.mxu0 0.0
    %182 = vmatpush1.msra.mxu0 %v160
    %183 = vmatprep.subr.mxu0 0.0
    %184 = vmatpush1.msra.mxu0 %v161
    %185 = vmatprep.subr.mxu0 0.0
    %186 = vmatpush1.msra.mxu0 %v162
    %187 = vmatprep.subr.mxu0 0.0
    %188 = vmatpush1.msra.mxu0 %v163
    %189 = vmatprep.subr.mxu0 0.0
    %190 = vmatpush1.msra.mxu0 0.0
    %191 = vmatprep.subr.mxu0 0.0
    %192 = vmatpush1.msra.mxu0 0.0
    %193 = vmatprep.subr.mxu0 0.0
    %194 = vmatpush1.msra.mxu0 0.0
    %195 = vmatprep.subr.mxu0 0.0
    %196 = vmatpush1.msra.mxu0 0.0
    %197 = vmatprep.subr.mxu0 0.0
    %198 = vmatpush1.msra.mxu0 0.0
    %199 = vmatprep.subr.mxu0 0.0
    %200 = vmatpush1.msra.mxu0 0.0
    %201 = vmatprep.subr.mxu0 0.0
    %202 = vmatpush1.msra.mxu0 0.0
    %203 = vmatprep.subr.mxu0 0.0
    %204 = vmatpush1.msra.mxu0 0.0
    %205 = vmatprep.subr.mxu0 0.0
    %206 = vmatpush1.msra.mxu0 0.0
    %207 = vmatprep.subr.mxu0 0.0
    %208 = vmatpush1.msra.mxu0 0.0
    %209 = vmatprep.subr.mxu0 0.0
    %210 = vmatpush1.msra.mxu0 0.0
    %211 = vmatprep.subr.mxu0 0.0
    %212 = vmatpush1.msra.mxu0 0.0
    %213 = vmatprep.subr.mxu0 0.0
    %214 = vmatpush1.msra.mxu0 0.0
    %215 = vmatprep.subr.mxu0 0.0
    %216 = vmatpush1.msra.mxu0 0.0
    %217 = vmatprep.subr.mxu0 0.0
    %218 = vmatpush1.msra.mxu0 0.0
    %219 = vmatprep.subr.mxu0 0.0
    %220 = vmatpush1.msra.mxu0 0.0
    %221 = vmatprep.subr.mxu0 0.0
    %222 = vmatpush1.msra.mxu0 0.0
    %223 = vmatprep.subr.mxu0 0.0
    %224 = vmatpush1.msra.mxu0 0.0
    %225 = vmatprep.subr.mxu0 0.0
    %226 = vmatpush1.msra.mxu0 0.0
    %227 = vmatprep.subr.mxu0 0.0
    %228 = vmatpush1.msra.mxu0 0.0
    %229 = vmatprep.subr.mxu0 0.0
    %230 = vmatpush1.msra.mxu0 0.0
    %231 = vmatprep.subr.mxu0 0.0
    %232 = vmatpush1.msra.mxu0 0.0
    %233 = vmatprep.subr.mxu0 0.0
    %234 = vmatpush1.msra.mxu0 0.0
    %235 = vmatprep.subr.mxu0 0.0
    %236 = vmatpush1.msra.mxu0 0.0
    %237 = vmatprep.mubr.f32.mxu0 0.0
    %238 = vmatmul.mubr.f32.gmra.mrb[0].mxu0 %v171
    %v239 = vpop.f32.mrb[0].mxu0
    %v240 = vadd.f32 %v168, %v239
    %v241 = vpop.f32.mrb[0].mxu0
    %242 = vdwg.mxu0
    %vm243 = vcmask 60416
    %v244 = vsel %vm243, %v240, -inf
    %245 = vmax.xlane.f32.xlu0 %v244
    %v246 = vpop.xlane.xlu0 %245
    %v247 = vsub.f32 %v240, %v246
    %v248 = vmul.f32 %v247, 1.442695
    %v249 = vpow.pop %v248
    %v250 = vsel %vm243, %v249, 0.0
    %251 = vadd.xlane.f32.xlu0 %v250
    %v252 = vpop.xlane.xlu0 %251
    %v253 = vrcp.pop %v252
    %v254 = vmul.f32 %v249, %v253
    %255 = vst.msk [vmem:[#allocation12] sm:$0xf] %vm243, %v254
    %v256 = vld [vmem:[%s4] sm:$0xff]
    %vm257 = vcmask 64512
    %v259 = vsel %vm257, %v254, 0
    %261 = vmatprep.subr.mxu0 0.0
    %262 = vmatpush1.msra.mxu0 %v256
    %263 = vmatprep.subr.mxu0 0.0
    %264 = vmatpush1.msra.mxu0 0.0
    %265 = vmatprep.subr.mxu0 0.0
    %266 = vmatpush1.msra.mxu0 0.0
    %267 = vmatprep.subr.mxu0 0.0
    %268 = vmatpush1.msra.mxu0 0.0
    %269 = vmatprep.subr.mxu0 0.0
    %270 = vmatpush1.msra.mxu0 0.0
    %271 = vmatprep.subr.mxu0 0.0
    %272 = vmatpush1.msra.mxu0 0.0
    %273 = vmatprep.subr.mxu0 0.0
    %274 = vmatpush1.msra.mxu0 0.0
    %275 = vmatprep.subr.mxu0 0.0
    %276 = vmatpush1.msra.mxu0 0.0
    %277 = vmatprep.subr.mxu0 0.0
    %278 = vmatpush1.msra.mxu0 0.0
    %279 = vmatprep.subr.mxu0 0.0
    %280 = vmatpush1.msra.mxu0 0.0
    %281 = vmatprep.subr.mxu0 0.0
    %282 = vmatpush1.msra.mxu0 0.0
    %283 = vmatprep.subr.mxu0 0.0
    %284 = vmatpush1.msra.mxu0 0.0
    %285 = vmatprep.subr.mxu0 0.0
    %286 = vmatpush1.msra.mxu0 0.0
    %287 = vmatprep.subr.mxu0 0.0
    %288 = vmatpush1.msra.mxu0 0.0
    %289 = vmatprep.subr.mxu0 0.0
    %290 = vmatpush1.msra.mxu0 0.0
    %291 = vmatprep.subr.mxu0 0.0
    %292 = vmatpush1.msra.mxu0 0.0
    %293 = vmatprep.subr.mxu0 0.0
    %294 = vmatpush1.msra.mxu0 0.0
    %295 = vmatprep.subr.mxu0 0.0
    %296 = vmatpush1.msra.mxu0 0.0
    %297 = vmatprep.subr.mxu0 0.0
    %298 = vmatpush1.msra.mxu0 0.0
    %299 = vmatprep.subr.mxu0 0.0
    %300 = vmatpush1.msra.mxu0 0.0
    %301 = vmatprep.subr.mxu0 0.0
    %302 = vmatpush1.msra.mxu0 0.0
    %303 = vmatprep.subr.mxu0 0.0
    %304 = vmatpush1.msra.mxu0 0.0
    %305 = vmatprep.subr.mxu0 0.0
    %306 = vmatpush1.msra.mxu0 0.0
    %307 = vmatprep.subr.mxu0 0.0
    %308 = vmatpush1.msra.mxu0 0.0
    %309 = vmatprep.subr.mxu0 0.0
    %310 = vmatpush1.msra.mxu0 0.0
    %311 = vmatprep.subr.mxu0 0.0
    %312 = vmatpush1.msra.mxu0 0.0
    %313 = vmatprep.subr.mxu0 0.0
    %314 = vmatpush1.msra.mxu0 0.0
    %315 = vmatprep.subr.mxu0 0.0
    %316 = vmatpush1.msra.mxu0 0.0
    %317 = vmatprep.subr.mxu0 0.0
    %318 = vmatpush1.msra.mxu0 0.0
    %319 = vmatprep.subr.mxu0 0.0
    %320 = vmatpush1.msra.mxu0 0.0
    %321 = vmatprep.subr.mxu0 0.0
    %322 = vmatpush1.msra.mxu0 0.0
    %323 = vmatprep.subr.mxu0 0.0
    %324 = vmatpush1.msra.mxu0 0.0
    %325 = vmatprep.mubr.f32.mxu0 0.0
    %326 = vmatmul.mubr.f32.gmra.mrb[0].mxu0 %v259
    %v327 = vpop.f32.mrb[0].mxu0
    %v328 = vadd.f32 0.0, %v327
    %v329 = vpop.f32.mrb[0].mxu0
    %330 = vdwg.mxu0
    %332 = vrot.lane.b32.xlu0 %v328, 32
    %v333 = vpop.permute.xlu0 %332
    %v335 = vsel %vm154, %v146, %v333
    %v336 = vld [vmem:[#allocation7 + $0x60] sm:$0xff]
    %v337 = vld [vmem:[#allocation7 + $0x68] sm:$0xff]
    %v338 = vld [vmem:[#allocation7 + $0x70] sm:$0xff]
    %v339 = vld [vmem:[#allocation7 + $0x78] sm:$0xff]
    %v340 = vld [vmem:[#allocation7 + $0x80] sm:$0xff]
    %v341 = vld [vmem:[#allocation7 + $0x88] sm:$0xff]
    %v342 = vld [vmem:[#allocation7 + $0x90] sm:$0xff]
    %v343 = vld [vmem:[#allocation7 + $0x98] sm:$0xff]
    %v344 = vld [vmem:[#allocation7 + $0xa0] sm:$0x1]
    %v345 = vlaneseq
    %v346 = vshrl.u32 %v345, 7
    %v347 = vsub.s32 0, %v346
    %v348 = vrot.slane %v344, %v347
    %v350 = vsel %vm169, %v335, 0
    %352 = vmatprep.subr.mxu0 0.0
    %353 = vmatpush1.msra.mxu0 %v336
    %354 = vmatprep.subr.mxu0 0.0
    %355 = vmatpush1.msra.mxu0 %v337
    %356 = vmatprep.subr.mxu0 0.0
    %357 = vmatpush1.msra.mxu0 %v338
    %358 = vmatprep.subr.mxu0 0.0
    %359 = vmatpush1.msra.mxu0 %v339
    %360 = vmatprep.subr.mxu0 0.0
    %361 = vmatpush1.msra.mxu0 %v340
    %362 = vmatprep.subr.mxu0 0.0
    %363 = vmatpush1.msra.mxu0 %v341
    %364 = vmatprep.subr.mxu0 0.0
    %365 = vmatpush1.msra.mxu0 %v342
    %366 = vmatprep.subr.mxu0 0.0
    %367 = vmatpush1.msra.mxu0 %v343
    %368 = vmatprep.subr.mxu0 0.0
    %369 = vmatpush1.msra.mxu0 0.0
    %370 = vmatprep.subr.mxu0 0.0
    %371 = vmatpush1.msra.mxu0 0.0
    %372 = vmatprep.subr.mxu0 0.0
    %373 = vmatpush1.msra.mxu0 0.0
    %374 = vmatprep.subr.mxu0 0.0
    %375 = vmatpush1.msra.mxu0 0.0
    %376 = vmatprep.subr.mxu0 0.0
    %377 = vmatpush1.msra.mxu0 0.0
    %378 = vmatprep.subr.mxu0 0.0
    %379 = vmatpush1.msra.mxu0 0.0
    %380 = vmatprep.subr.mxu0 0.0
    %381 = vmatpush1.msra.mxu0 0.0
    %382 = vmatprep.subr.mxu0 0.0
    %383 = vmatpush1.msra.mxu0 0.0
    %384 = vmatprep.subr.mxu0 0.0
    %385 = vmatpush1.msra.mxu0 0.0
    %386 = vmatprep.subr.mxu0 0.0
    %387 = vmatpush1.msra.mxu0 0.0
    %388 = vmatprep.subr.mxu0 0.0
    %389 = vmatpush1.msra.mxu0 0.0
    %390 = vmatprep.subr.mxu0 0.0
    %391 = vmatpush1.msra.mxu0 0.0
    %392 = vmatprep.subr.mxu0 0.0
    %393 = vmatpush1.msra.mxu0 0.0
    %394 = vmatprep.subr.mxu0 0.0
    %395 = vmatpush1.msra.mxu0 0.0
    %396 = vmatprep.subr.mxu0 0.0
    %397 = vmatpush1.msra.mxu0 0.0
    %398 = vmatprep.subr.mxu0 0.0
    %399 = vmatpush1.msra.mxu0 0.0
    %400 = vmatprep.subr.mxu0 0.0
    %401 = vmatpush1.msra.mxu0 0.0
    %402 = vmatprep.subr.mxu0 0.0
    %403 = vmatpush1.msra.mxu0 0.0
    %404 = vmatprep.subr.mxu0 0.0
    %405 = vmatpush1.msra.mxu0 0.0
    %406 = vmatprep.subr.mxu0 0.0
    %407 = vmatpush1.msra.mxu0 0.0
    %408 = vmatprep.subr.mxu0 0.0
    %409 = vmatpush1.msra.mxu0 0.0
    %410 = vmatprep.subr.mxu0 0.0
    %411 = vmatpush1.msra.mxu0 0.0
    %412 = vmatprep.subr.mxu0 0.0
    %413 = vmatpush1.msra.mxu0 0.0
    %414 = vmatprep.subr.mxu0 0.0
    %415 = vmatpush1.msra.mxu0 0.0
    %416 = vmatprep.mubr.f32.mxu0 0.0
    %417 = vmatmul.mubr.f32.gmra.mrb[0].mxu0 %v350
    %v418 = vpop.f32.mrb[0].mxu0
    %v419 = vadd.f32 %v348, %v418
    %v420 = vpop.f32.mrb[0].mxu0
    %421 = vdwg.mxu0
    %v422 = vmax.f32 %v419, 0.0
    %v423 = vld [vmem:[#allocation7 + $0xa8] sm:$0xff]
    %v424 = vld [vmem:[#allocation7 + $0xb0] sm:$0xff]
    %v425 = vld [vmem:[#allocation7 + $0xb8] sm:$0xff]
    %v426 = vld [vmem:[#allocation7 + $0xc0] sm:$0xff]
    %v427 = vld [vmem:[#allocation7 + $0xe8] sm:$0x1]
    %v428 = vlaneseq
    %v429 = vshrl.u32 %v428, 7
    %v430 = vsub.s32 0, %v429
    %v431 = vrot.slane %v427, %v430
    %v433 = vsel %vm154, %v422, 0
    %435 = vmatprep.subr.mxu0 0.0
    %436 = vmatpush1.msra.mxu0 %v423
    %437 = vmatprep.subr.mxu0 0.0
    %438 = vmatpush1.msra.mxu0 %v424
    %439 = vmatprep.subr.mxu0 0.0
    %440 = vmatpush1.msra.mxu0 %v425
    %441 = vmatprep.subr.mxu0 0.0
    %442 = vmatpush1.msra.mxu0 %v426
    %443 = vmatprep.subr.mxu0 0.0
    %444 = vmatpush1.msra.mxu0 0.0
    %445 = vmatprep.subr.mxu0 0.0
    %446 = vmatpush1.msra.mxu0 0.0
    %447 = vmatprep.subr.mxu0 0.0
    %448 = vmatpush1.msra.mxu0 0.0
    %449 = vmatprep.subr.mxu0 0.0
    %450 = vmatpush1.msra.mxu0 0.0
    %451 = vmatprep.subr.mxu0 0.0
    %452 = vmatpush1.msra.mxu0 0.0
    %453 = vmatprep.subr.mxu0 0.0
    %454 = vmatpush1.msra.mxu0 0.0
    %455 = vmatprep.subr.mxu0 0.0
    %456 = vmatpush1.msra.mxu0 0.0
    %457 = vmatprep.subr.mxu0 0.0
    %458 = vmatpush1.msra.mxu0 0.0
    %459 = vmatprep.subr.mxu0 0.0
    %460 = vmatpush1.msra.mxu0 0.0
    %461 = vmatprep.subr.mxu0 0.0
    %462 = vmatpush1.msra.mxu0 0.0
    %463 = vmatprep.subr.mxu0 0.0
    %464 = vmatpush1.msra.mxu0 0.0
    %465 = vmatprep.subr.mxu0 0.0
    %466 = vmatpush1.msra.mxu0 0.0
    %467 = vmatprep.subr.mxu0 0.0
    %468 = vmatpush1.msra.mxu0 0.0
    %469 = vmatprep.subr.mxu0 0.0
    %470 = vmatpush1.msra.mxu0 0.0
    %471 = vmatprep.subr.mxu0 0.0
    %472 = vmatpush1.msra.mxu0 0.0
    %473 = vmatprep.subr.mxu0 0.0
    %474 = vmatpush1.msra.mxu0 0.0
    %475 = vmatprep.subr.mxu0 0.0
    %476 = vmatpush1.msra.mxu0 0.0
    %477 = vmatprep.subr.mxu0 0.0
    %478 = vmatpush1.msra.mxu0 0.0
    %479 = vmatprep.subr.mxu0 0.0
    %480 = vmatpush1.msra.mxu0 0.0
    %481 = vmatprep.subr.mxu0 0.0
    %482 = vmatpush1.msra.mxu0 0.0
    %483 = vmatprep.subr.mxu0 0.0
    %484 = vmatpush1.msra.mxu0 0.0
    %485 = vmatprep.subr.mxu0 0.0
    %486 = vmatpush1.msra.mxu0 0.0
    %487 = vmatprep.subr.mxu0 0.0
    %488 = vmatpush1.msra.mxu0 0.0
    %489 = vmatprep.subr.mxu0 0.0
    %490 = vmatpush1.msra.mxu0 0.0
    %491 = vmatprep.subr.mxu0 0.0
    %492 = vmatpush1.msra.mxu0 0.0
    %493 = vmatprep.subr.mxu0 0.0
    %494 = vmatpush1.msra.mxu0 0.0
    %495 = vmatprep.subr.mxu0 0.0
    %496 = vmatpush1.msra.mxu0 0.0
    %497 = vmatprep.subr.mxu0 0.0
    %498 = vmatpush1.msra.mxu0 0.0
    %499 = vmatprep.mubr.f32.mxu0 0.0
    %500 = vmatmul.mubr.f32.gmra.mrb[0].mxu0 %v433
    %v501 = vpop.f32.mrb[0].mxu0
    %v502 = vadd.f32 %v431, %v501
    %v503 = vpop.f32.mrb[0].mxu0
    %504 = vdwg.mxu0
    %v505 = vld [vmem:[#allocation7 + $0xc8] sm:$0xff]
    %v506 = vld [vmem:[#allocation7 + $0xd0] sm:$0xff]
    %v507 = vld [vmem:[#allocation7 + $0xd8] sm:$0xff]
    %v508 = vld [vmem:[#allocation7 + $0xe0] sm:$0xff]
    %v509 = vld [vmem:[%s2] sm:$0x1]
    %v510 = vld [vmem:[%s3] sm:$0x1]
    %v512 = vsel %vm154, %v509, 0
    %514 = vmatprep.subr.mxu0 0.0
    %515 = vmatpush1.msra.mxu0 %v505
    %516 = vmatprep.subr.mxu0 0.0
    %517 = vmatpush1.msra.mxu0 %v506
    %518 = vmatprep.subr.mxu0 0.0
    %519 = vmatpush1.msra.mxu0 %v507
    %520 = vmatprep.subr.mxu0 0.0
    %521 = vmatpush1.msra.mxu0 %v508
    %522 = vmatprep.subr.mxu0 0.0
    %523 = vmatpush1.msra.mxu0 0.0
    %524 = vmatprep.subr.mxu0 0.0
    %525 = vmatpush1.msra.mxu0 0.0
    %526 = vmatprep.subr.mxu0 0.0
    %527 = vmatpush1.msra.mxu0 0.0
    %528 = vmatprep.subr.mxu0 0.0
    %529 = vmatpush1.msra.mxu0 0.0
    %530 = vmatprep.subr.mxu0 0.0
    %531 = vmatpush1.msra.mxu0 0.0
    %532 = vmatprep.subr.mxu0 0.0
    %533 = vmatpush1.msra.mxu0 0.0
    %534 = vmatprep.subr.mxu0 0.0
    %535 = vmatpush1.msra.mxu0 0.0
    %536 = vmatprep.subr.mxu0 0.0
    %537 = vmatpush1.msra.mxu0 0.0
    %538 = vmatprep.subr.mxu0 0.0
    %539 = vmatpush1.msra.mxu0 0.0
    %540 = vmatprep.subr.mxu0 0.0
    %541 = vmatpush1.msra.mxu0 0.0
    %542 = vmatprep.subr.mxu0 0.0
    %543 = vmatpush1.msra.mxu0 0.0
    %544 = vmatprep.subr.mxu0 0.0
    %545 = vmatpush1.msra.mxu0 0.0
    %546 = vmatprep.subr.mxu0 0.0
    %547 = vmatpush1.msra.mxu0 0.0
    %548 = vmatprep.subr.mxu0 0.0
    %549 = vmatpush1.msra.mxu0 0.0
    %550 = vmatprep.subr.mxu0 0.0
    %551 = vmatpush1.msra.mxu0 0.0
    %552 = vmatprep.subr.mxu0 0.0
    %553 = vmatpush1.msra.mxu0 0.0
    %554 = vmatprep.subr.mxu0 0.0
    %555 = vmatpush1.msra.mxu0 0.0
    %556 = vmatprep.subr.mxu0 0.0
    %557 = vmatpush1.msra.mxu0 0.0
    %558 = vmatprep.subr.mxu0 0.0
    %559 = vmatpush1.msra.mxu0 0.0
    %560 = vmatprep.subr.mxu0 0.0
    %561 = vmatpush1.msra.mxu0 0.0
    %562 = vmatprep.subr.mxu0 0.0
    %563 = vmatpush1.msra.mxu0 0.0
    %564 = vmatprep.subr.mxu0 0.0
    %565 = vmatpush1.msra.mxu0 0.0
    %566 = vmatprep.subr.mxu0 0.0
    %567 = vmatpush1.msra.mxu0 0.0
    %568 = vmatprep.subr.mxu0 0.0
    %569 = vmatpush1.msra.mxu0 0.0
    %570 = vmatprep.subr.mxu0 0.0
    %571 = vmatpush1.msra.mxu0 0.0
    %572 = vmatprep.subr.mxu0 0.0
    %573 = vmatpush1.msra.mxu0 0.0
    %574 = vmatprep.subr.mxu0 0.0
    %575 = vmatpush1.msra.mxu0 0.0
    %576 = vmatprep.subr.mxu0 0.0
    %577 = vmatpush1.msra.mxu0 0.0
    %578 = vmatprep.mubr.f32.mxu0 0.0
    %579 = vmatmul.mubr.f32.gmra.mrb[0].mxu0 %v512
    %v580 = vpop.f32.mrb[0].mxu0
    %v581 = vadd.f32 0.0, %v580
    %v582 = vpop.f32.mrb[0].mxu0
    %583 = vdwg.mxu0
    %v584 = vadd.f32 %v502, %v581
    %v585 = vxor.u32 %v584, 2147483648
    %v586 = vmul.f32 %v585, 1.442695
    %v587 = vpow.pop %v586
    %v588 = vadd.f32 %v587, 1.0
    %v589 = vrcp.pop %v588
    %v590 = vmul.f32 1.0, %v589
    %v591 = vtanh.pop %v584
    %v593 = vlaneseq
    %v594 = vshrl.u32 %v593, 7
    %v595 = vsub.s32 0, %v594
    %v596 = vrot.slane %v510, %v595
    %597 = vrot.lane.b32.xlu0 %v596, 32
    %v598 = vpop.permute.xlu0 %597
    %v600 = vmul.f32 %v590, %v598
    %602 = vrot.lane.b32.xlu0 %v591, 32
    %v603 = vpop.permute.xlu0 %602
    %v605 = vmul.f32 %v590, %v603
    %607 = vrot.lane.b32.xlu0 %v605, 32
    %v608 = vpop.permute.xlu0 %607
    %v610 = vadd.f32 %v600, %v608
    %v611 = vtanh.pop %v610
    %613 = vrot.lane.b32.xlu0 %v611, 32
    %v614 = vpop.permute.xlu0 %613
    %v616 = vmul.f32 %v590, %v614
    %618 = vrot.lane.b32.xlu0 %v616, 64
    %v619 = vpop.permute.xlu0 %618
    %v620 = vsel %vm154, %v619, 0
    %622 = vmatprep.subr.mxu0 0.0
    %623 = vmatpush1.msra.mxu0 %v505
    %624 = vmatprep.subr.mxu0 0.0
    %625 = vmatpush1.msra.mxu0 %v506
    %626 = vmatprep.subr.mxu0 0.0
    %627 = vmatpush1.msra.mxu0 %v507
    %628 = vmatprep.subr.mxu0 0.0
    %629 = vmatpush1.msra.mxu0 %v508
    %630 = vmatprep.subr.mxu0 0.0
    %631 = vmatpush1.msra.mxu0 0.0
    %632 = vmatprep.subr.mxu0 0.0
    %633 = vmatpush1.msra.mxu0 0.0
    %634 = vmatprep.subr.mxu0 0.0
    %635 = vmatpush1.msra.mxu0 0.0
    %636 = vmatprep.subr.mxu0 0.0
    %637 = vmatpush1.msra.mxu0 0.0
    %638 = vmatprep.subr.mxu0 0.0
    %639 = vmatpush1.msra.mxu0 0.0
    %640 = vmatprep.subr.mxu0 0.0
    %641 = vmatpush1.msra.mxu0 0.0
    %642 = vmatprep.subr.mxu0 0.0
    %643 = vmatpush1.msra.mxu0 0.0
    %644 = vmatprep.subr.mxu0 0.0
    %645 = vmatpush1.msra.mxu0 0.0
    %646 = vmatprep.subr.mxu0 0.0
    %647 = vmatpush1.msra.mxu0 0.0
    %648 = vmatprep.subr.mxu0 0.0
    %649 = vmatpush1.msra.mxu0 0.0
    %650 = vmatprep.subr.mxu0 0.0
    %651 = vmatpush1.msra.mxu0 0.0
    %652 = vmatprep.subr.mxu0 0.0
    %653 = vmatpush1.msra.mxu0 0.0
    %654 = vmatprep.subr.mxu0 0.0
    %655 = vmatpush1.msra.mxu0 0.0
    %656 = vmatprep.subr.mxu0 0.0
    %657 = vmatpush1.msra.mxu0 0.0
    %658 = vmatprep.subr.mxu0 0.0
    %659 = vmatpush1.msra.mxu0 0.0
    %660 = vmatprep.subr.mxu0 0.0
    %661 = vmatpush1.msra.mxu0 0.0
    %662 = vmatprep.subr.mxu0 0.0
    %663 = vmatpush1.msra.mxu0 0.0
    %664 = vmatprep.subr.mxu0 0.0
    %665 = vmatpush1.msra.mxu0 0.0
    %666 = vmatprep.subr.mxu0 0.0
    %667 = vmatpush1.msra.mxu0 0.0
    %668 = vmatprep.subr.mxu0 0.0
    %669 = vmatpush1.msra.mxu0 0.0
    %670 = vmatprep.subr.mxu0 0.0
    %671 = vmatpush1.msra.mxu0 0.0
    %672 = vmatprep.subr.mxu0 0.0
    %673 = vmatpush1.msra.mxu0 0.0
    %674 = vmatprep.subr.mxu0 0.0
    %675 = vmatpush1.msra.mxu0 0.0
    %676 = vmatprep.subr.mxu0 0.0
    %677 = vmatpush1.msra.mxu0 0.0
    %678 = vmatprep.subr.mxu0 0.0
    %679 = vmatpush1.msra.mxu0 0.0
    %680 = vmatprep.subr.mxu0 0.0
    %681 = vmatpush1.msra.mxu0 0.0
    %682 = vmatprep.subr.mxu0 0.0
    %683 = vmatpush1.msra.mxu0 0.0
    %684 = vmatprep.subr.mxu0 0.0
    %685 = vmatpush1.msra.mxu0 0.0
    %686 = vmatprep.mubr.f32.mxu0 0.0
    %687 = vmatmul.mubr.f32.gmra.mrb[0].mxu0 %v620
    %v688 = vpop.f32.mrb[0].mxu0
    %v689 = vadd.f32 0.0, %v688
    %v690 = vpop.f32.mrb[0].mxu0
    %691 = vdwg.mxu0
    %v693 = vrot.slane %v689, 7
    %v695 = vadd.f32 %v502, %v693
    %v696 = vxor.u32 %v695, 2147483648
    %v697 = vmul.f32 %v696, 1.442695
    %v698 = vpow.pop %v697
    %v699 = vadd.f32 %v698, 1.0
    %v700 = vrcp.pop %v699
    %v701 = vmul.f32 1.0, %v700
    %v702 = vtanh.pop %v695
    %v704 = vrot.slane %v610, 7
    %v706 = vmul.f32 %v701, %v704
    %708 = vrot.lane.b32.xlu0 %v702, 32
    %v709 = vpop.permute.xlu0 %708
    %v711 = vmul.f32 %v701, %v709
    %713 = vrot.lane.b32.xlu0 %v711, 32
    %v714 = vpop.permute.xlu0 %713
    %v716 = vadd.f32 %v706, %v714
    %v717 = vtanh.pop %v716
    %719 = vrot.lane.b32.xlu0 %v717, 32
    %v720 = vpop.permute.xlu0 %719
    %v722 = vmul.f32 %v701, %v720
    %v724 = vrot.slane %v722, 1
    %725 = vrot.lane.b32.xlu0 %v724, 64
    %v726 = vpop.permute.xlu0 %725
    %v727 = vsel %vm154, %v726, 0
    %729 = vmatprep.subr.mxu0 0.0
    %730 = vmatpush1.msra.mxu0 %v505
    %731 = vmatprep.subr.mxu0 0.0
    %732 = vmatpush1.msra.mxu0 %v506
    %733 = vmatprep.subr.mxu0 0.0
    %734 = vmatpush1.msra.mxu0 %v507
    %735 = vmatprep.subr.mxu0 0.0
    %736 = vmatpush1.msra.mxu0 %v508
    %737 = vmatprep.subr.mxu0 0.0
    %738 = vmatpush1.msra.mxu0 0.0
    %739 = vmatprep.subr.mxu0 0.0
    %740 = vmatpush1.msra.mxu0 0.0
    %741 = vmatprep.subr.mxu0 0.0
    %742 = vmatpush1.msra.mxu0 0.0
    %743 = vmatprep.subr.mxu0 0.0
    %744 = vmatpush1.msra.mxu0 0.0
    %745 = vmatprep.subr.mxu0 0.0
    %746 = vmatpush1.msra.mxu0 0.0
    %747 = vmatprep.subr.mxu0 0.0
    %748 = vmatpush1.msra.mxu0 0.0
    %749 = vmatprep.subr.mxu0 0.0
    %750 = vmatpush1.msra.mxu0 0.0
    %751 = vmatprep.subr.mxu0 0.0
    %752 = vmatpush1.msra.mxu0 0.0
    %753 = vmatprep.subr.mxu0 0.0
    %754 = vmatpush1.msra.mxu0 0.0
    %755 = vmatprep.subr.mxu0 0.0
    %756 = vmatpush1.msra.mxu0 0.0
    %757 = vmatprep.subr.mxu0 0.0
    %758 = vmatpush1.msra.mxu0 0.0
    %759 = vmatprep.subr.mxu0 0.0
    %760 = vmatpush1.msra.mxu0 0.0
    %761 = vmatprep.subr.mxu0 0.0
    %762 = vmatpush1.msra.mxu0 0.0
    %763 = vmatprep.subr.mxu0 0.0
    %764 = vmatpush1.msra.mxu0 0.0
    %765 = vmatprep.subr.mxu0 0.0
    %766 = vmatpush1.msra.mxu0 0.0
    %767 = vmatprep.subr.mxu0 0.0
    %768 = vmatpush1.msra.mxu0 0.0
    %769 = vmatprep.subr.mxu0 0.0
    %770 = vmatpush1.msra.mxu0 0.0
    %771 = vmatprep.subr.mxu0 0.0
    %772 = vmatpush1.msra.mxu0 0.0
    %773 = vmatprep.subr.mxu0 0.0
    %774 = vmatpush1.msra.mxu0 0.0
    %775 = vmatprep.subr.mxu0 0.0
    %776 = vmatpush1.msra.mxu0 0.0
    %777 = vmatprep.subr.mxu0 0.0
    %778 = vmatpush1.msra.mxu0 0.0
    %779 = vmatprep.subr.mxu0 0.0
    %780 = vmatpush1.msra.mxu0 0.0
    %781 = vmatprep.subr.mxu0 0.0
    %782 = vmatpush1.msra.mxu0 0.0
    %783 = vmatprep.subr.mxu0 0.0
    %784 = vmatpush1.msra.mxu0 0.0
    %785 = vmatprep.subr.mxu0 0.0
    %786 = vmatpush1.msra.mxu0 0.0
    %787 = vmatprep.subr.mxu0 0.0
    %788 = vmatpush1.msra.mxu0 0.0
    %789 = vmatprep.subr.mxu0 0.0
    %790 = vmatpush1.msra.mxu0 0.0
    %791 = vmatprep.subr.mxu0 0.0
    %792 = vmatpush1.msra.mxu0 0.0
    %793 = vmatprep.mubr.f32.mxu0 0.0
    %794 = vmatmul.mubr.f32.gmra.mrb[0].mxu0 %v727
    %v795 = vpop.f32.mrb[0].mxu0
    %v796 = vadd.f32 0.0, %v795
    %v797 = vpop.f32.mrb[0].mxu0
    %798 = vdwg.mxu0
    %v800 = vrot.slane %v796, 6
    %v802 = vadd.f32 %v502, %v800
    %v803 = vxor.u32 %v802, 2147483648
    %v804 = vmul.f32 %v803, 1.442695
    %v805 = vpow.pop %v804
    %v806 = vadd.f32 %v805, 1.0
    %v807 = vrcp.pop %v806
    %v808 = vmul.f32 1.0, %v807
    %v809 = vtanh.pop %v802
    %v811 = vrot.slane %v716, 7
    %v813 = vmul.f32 %v808, %v811
    %815 = vrot.lane.b32.xlu0 %v809, 32
    %v816 = vpop.permute.xlu0 %815
    %v818 = vmul.f32 %v808, %v816
    %820 = vrot.lane.b32.xlu0 %v818, 32
    %v821 = vpop.permute.xlu0 %820
    %v823 = vadd.f32 %v813, %v821
    %v824 = vtanh.pop %v823
    %826 = vrot.lane.b32.xlu0 %v824, 32
    %v827 = vpop.permute.xlu0 %826
    %v829 = vmul.f32 %v808, %v827
    %v831 = vrot.slane %v829, 2
    %832 = vrot.lane.b32.xlu0 %v831, 64
    %v833 = vpop.permute.xlu0 %832
    %v834 = vsel %vm154, %v833, 0
    %836 = vmatprep.subr.mxu0 0.0
    %837 = vmatpush1.msra.mxu0 %v505
    %838 = vmatprep.subr.mxu0 0.0
    %839 = vmatpush1.msra.mxu0 %v506
    %840 = vmatprep.subr.mxu0 0.0
    %841 = vmatpush1.msra.mxu0 %v507
    %842 = vmatprep.subr.mxu0 0.0
    %843 = vmatpush1.msra.mxu0 %v508
    %844 = vmatprep.subr.mxu0 0.0
    %845 = vmatpush1.msra.mxu0 0.0
    %846 = vmatprep.subr.mxu0 0.0
    %847 = vmatpush1.msra.mxu0 0.0
    %848 = vmatprep.subr.mxu0 0.0
    %849 = vmatpush1.msra.mxu0 0.0
    %850 = vmatprep.subr.mxu0 0.0
    %851 = vmatpush1.msra.mxu0 0.0
    %852 = vmatprep.subr.mxu0 0.0
    %853 = vmatpush1.msra.mxu0 0.0
    %854 = vmatprep.subr.mxu0 0.0
    %855 = vmatpush1.msra.mxu0 0.0
    %856 = vmatprep.subr.mxu0 0.0
    %857 = vmatpush1.msra.mxu0 0.0
    %858 = vmatprep.subr.mxu0 0.0
    %859 = vmatpush1.msra.mxu0 0.0
    %860 = vmatprep.subr.mxu0 0.0
    %861 = vmatpush1.msra.mxu0 0.0
    %862 = vmatprep.subr.mxu0 0.0
    %863 = vmatpush1.msra.mxu0 0.0
    %864 = vmatprep.subr.mxu0 0.0
    %865 = vmatpush1.msra.mxu0 0.0
    %866 = vmatprep.subr.mxu0 0.0
    %867 = vmatpush1.msra.mxu0 0.0
    %868 = vmatprep.subr.mxu0 0.0
    %869 = vmatpush1.msra.mxu0 0.0
    %870 = vmatprep.subr.mxu0 0.0
    %871 = vmatpush1.msra.mxu0 0.0
    %872 = vmatprep.subr.mxu0 0.0
    %873 = vmatpush1.msra.mxu0 0.0
    %874 = vmatprep.subr.mxu0 0.0
    %875 = vmatpush1.msra.mxu0 0.0
    %876 = vmatprep.subr.mxu0 0.0
    %877 = vmatpush1.msra.mxu0 0.0
    %878 = vmatprep.subr.mxu0 0.0
    %879 = vmatpush1.msra.mxu0 0.0
    %880 = vmatprep.subr.mxu0 0.0
    %881 = vmatpush1.msra.mxu0 0.0
    %882 = vmatprep.subr.mxu0 0.0
    %883 = vmatpush1.msra.mxu0 0.0
    %884 = vmatprep.subr.mxu0 0.0
    %885 = vmatpush1.msra.mxu0 0.0
    %886 = vmatprep.subr.mxu0 0.0
    %887 = vmatpush1.msra.mxu0 0.0
    %888 = vmatprep.subr.mxu0 0.0
    %889 = vmatpush1.msra.mxu0 0.0
    %890 = vmatprep.subr.mxu0 0.0
    %891 = vmatpush1.msra.mxu0 0.0
    %892 = vmatprep.subr.mxu0 0.0
    %893 = vmatpush1.msra.mxu0 0.0
    %894 = vmatprep.subr.mxu0 0.0
    %895 = vmatpush1.msra.mxu0 0.0
    %896 = vmatprep.subr.mxu0 0.0
    %897 = vmatpush1.msra.mxu0 0.0
    %898 = vmatprep.subr.mxu0 0.0
    %899 = vmatpush1.msra.mxu0 0.0
    %900 = vmatprep.mubr.f32.mxu0 0.0
    %901 = vmatmul.mubr.f32.gmra.mrb[0].mxu0 %v834
    %v902 = vpop.f32.mrb[0].mxu0
    %v903 = vadd.f32 0.0, %v902
    %v904 = vpop.f32.mrb[0].mxu0
    %905 = vdwg.mxu0
    %v907 = vrot.slane %v903, 5
    %v909 = vadd.f32 %v502, %v907
    %v910 = vxor.u32 %v909, 2147483648
    %v911 = vmul.f32 %v910, 1.442695
    %v912 = vpow.pop %v911
    %v913 = vadd.f32 %v912, 1.0
    %v914 = vrcp.pop %v913
    %v915 = vmul.f32 1.0, %v914
    %v916 = vtanh.pop %v909
    %v918 = vrot.slane %v823, 7
    %v920 = vmul.f32 %v915, %v918
    %922 = vrot.lane.b32.xlu0 %v916, 32
    %v923 = vpop.permute.xlu0 %922
    %v925 = vmul.f32 %v915, %v923
    %927 = vrot.lane.b32.xlu0 %v925, 32
    %v928 = vpop.permute.xlu0 %927
    %v930 = vadd.f32 %v920, %v928
    %v931 = vtanh.pop %v930
    %933 = vrot.lane.b32.xlu0 %v931, 32
    %v934 = vpop.permute.xlu0 %933
    %v936 = vmul.f32 %v915, %v934
    %938 = vrot.lane.b32.xlu0 %v936, 64
    %v939 = vpop.permute.xlu0 %938
    %vm941 = vcmask 257027
    %942 = vst.msk [vmem:[#allocation9 - $0x3] sm:$0x8] %vm941, %v939
    %944 = vrot.lane.b32.xlu0 %v930, 96
    %v945 = vpop.permute.xlu0 %944
    %947 = vst.msk [vmem:[#allocation11 - $0x3] sm:$0x8] %vm941, %v945
    %vm948 = vcmask 1040384
    %v949 = vsel %vm948, %v616, %v722
    %vm950 = vcmask 1041408
    %v951 = vsel %vm950, %v949, %v829
    %vm952 = vcmask 1042432
    %v953 = vsel %vm952, %v951, %v936
    %v954 = vld [vmem:[#allocation7 + $0xf0] sm:$0xff]
    %v955 = vld [vmem:[#allocation7 + $0xf8] sm:$0xff]
    %v956 = vld [vmem:[#allocation7 + $0x100] sm:$0xff]
    %v957 = vld [vmem:[#allocation7 + $0x108] sm:$0xff]
    %v958 = vld [vmem:[#allocation7 + $0x110] sm:$0x1]
    %v959 = vlaneseq
    %v960 = vshrl.u32 %v959, 7
    %v961 = vsub.s32 0, %v960
    %v962 = vrot.slane %v958, %v961
    %964 = vrot.lane.b32.xlu0 %v953, 64
    %v965 = vpop.permute.xlu0 %964
    %v966 = vsel %vm154, %v965, 0
    %968 = vmatprep.subr.mxu0 0.0
    %969 = vmatpush1.msra.mxu0 %v954
    %970 = vmatprep.subr.mxu0 0.0
    %971 = vmatpush1.msra.mxu0 %v955
    %972 = vmatprep.subr.mxu0 0.0
    %973 = vmatpush1.msra.mxu0 %v956
    %974 = vmatprep.subr.mxu0 0.0
    %975 = vmatpush1.msra.mxu0 %v957
    %976 = vmatprep.subr.mxu0 0.0
    %977 = vmatpush1.msra.mxu0 0.0
    %978 = vmatprep.subr.mxu0 0.0
    %979 = vmatpush1.msra.mxu0 0.0
    %980 = vmatprep.subr.mxu0 0.0
    %981 = vmatpush1.msra.mxu0 0.0
    %982 = vmatprep.subr.mxu0 0.0
    %983 = vmatpush1.msra.mxu0 0.0
    %984 = vmatprep.subr.mxu0 0.0
    %985 = vmatpush1.msra.mxu0 0.0
    %986 = vmatprep.subr.mxu0 0.0
    %987 = vmatpush1.msra.mxu0 0.0
    %988 = vmatprep.subr.mxu0 0.0
    %989 = vmatpush1.msra.mxu0 0.0
    %990 = vmatprep.subr.mxu0 0.0
    %991 = vmatpush1.msra.mxu0 0.0
    %992 = vmatprep.subr.mxu0 0.0
    %993 = vmatpush1.msra.mxu0 0.0
    %994 = vmatprep.subr.mxu0 0.0
    %995 = vmatpush1.msra.mxu0 0.0
    %996 = vmatprep.subr.mxu0 0.0
    %997 = vmatpush1.msra.mxu0 0.0
    %998 = vmatprep.subr.mxu0 0.0
    %999 = vmatpush1.msra.mxu0 0.0
    %1000 = vmatprep.subr.mxu0 0.0
    %1001 = vmatpush1.msra.mxu0 0.0
    %1002 = vmatprep.subr.mxu0 0.0
    %1003 = vmatpush1.msra.mxu0 0.0
    %1004 = vmatprep.subr.mxu0 0.0
    %1005 = vmatpush1.msra.mxu0 0.0
    %1006 = vmatprep.subr.mxu0 0.0
    %1007 = vmatpush1.msra.mxu0 0.0
    %1008 = vmatprep.subr.mxu0 0.0
    %1009 = vmatpush1.msra.mxu0 0.0
    %1010 = vmatprep.subr.mxu0 0.0
    %1011 = vmatpush1.msra.mxu0 0.0
    %1012 = vmatprep.subr.mxu0 0.0
    %1013 = vmatpush1.msra.mxu0 0.0
    %1014 = vmatprep.subr.mxu0 0.0
    %1015 = vmatpush1.msra.mxu0 0.0
    %1016 = vmatprep.subr.mxu0 0.0
    %1017 = vmatpush1.msra.mxu0 0.0
    %1018 = vmatprep.subr.mxu0 0.0
    %1019 = vmatpush1.msra.mxu0 0.0
    %1020 = vmatprep.subr.mxu0 0.0
    %1021 = vmatpush1.msra.mxu0 0.0
    %1022 = vmatprep.subr.mxu0 0.0
    %1023 = vmatpush1.msra.mxu0 0.0
    %1024 = vmatprep.subr.mxu0 0.0
    %1025 = vmatpush1.msra.mxu0 0.0
    %1026 = vmatprep.subr.mxu0 0.0
    %1027 = vmatpush1.msra.mxu0 0.0
    %1028 = vmatprep.subr.mxu0 0.0
    %1029 = vmatpush1.msra.mxu0 0.0
    %1030 = vmatprep.subr.mxu0 0.0
    %1031 = vmatpush1.msra.mxu0 0.0
    %1032 = vmatprep.mubr.f32.mxu0 0.0
    %1033 = vmatmul.mubr.f32.gmra.mrb[0].mxu0 %v966
    %v1034 = vpop.f32.mrb[0].mxu0
    %v1035 = vadd.f32 %v962, %v1034
    %v1036 = vpop.f32.mrb[0].mxu0
    %1037 = vdwg.mxu0
    %v1038 = vsel %vm243, %v1035, -inf
    %1039 = vmax.xlane.f32.xlu0 %v1038
    %v1040 = vpop.xlane.xlu0 %1039
    %v1041 = vsub.f32 %v1035, %v1040
    %v1042 = vmul.f32 %v1041, 1.442695
    %v1043 = vpow.pop %v1042
    %v1044 = vsel %vm243, %v1043, 0.0
    %1045 = vadd.xlane.f32.xlu0 %v1044
    %v1046 = vpop.xlane.xlu0 %1045
    %v1047 = vrcp.pop %v1046
    %v1048 = vmul.f32 %v1043, %v1047
    %1049 = vst.msk [vmem:[#allocation8] sm:$0xf] %vm243, %v1048
    // Predicated region
    $region38: #{tpu_custom_call.1} parent=1 // pred_check
      _
    $region39: #{tpu_custom_call.1} parent=1 // pred_check_branch
      %1051 = sbr.rel (0) target = $region41
    $region40: #{tpu_custom_call.1} parent=1 // pred_region
      %s1053 = ssub.s32 64, 64
      %1054 = vsyncadd [#allocation4], %s1053
      %s1056 = sshll.u32 [#allocation8], 4
      %s1057 = int_to_ptr.vmem [resolvable:$true] %s1056
      %1059 = dma.vmem_to_hbm [thread:$0]  %s1057, 64, %s6, [#allocation4]
    $region41: #{tpu_custom_call.1} parent=1 // pred_fallthru
      _
    // Predicated region
    $region42: #{tpu_custom_call.1} parent=1 // pred_check
      _
    $region43: #{tpu_custom_call.1} parent=1 // pred_check_branch
      %1061 = sbr.rel (0) target = $region45
    $region44: #{tpu_custom_call.1} parent=1 // pred_region
      %s1063 = ssub.s32 16, 16
      %1064 = vsyncadd [#allocation10], %s1063
      %s1066 = sshll.u32 [#allocation9], 4
      %s1067 = int_to_ptr.vmem [resolvable:$true] %s1066
      %1069 = dma.vmem_to_hbm [thread:$0]  %s1067, 16, %s7, [#allocation10]
    $region45: #{tpu_custom_call.1} parent=1 // pred_fallthru
      _
    // Predicated region
    $region46: #{tpu_custom_call.1} parent=1 // pred_check
      _
    $region47: #{tpu_custom_call.1} parent=1 // pred_check_branch
      %1071 = sbr.rel (0) target = $region49
    $region48: #{tpu_custom_call.1} parent=1 // pred_region
      %s1073 = ssub.s32 16, 16
      %1074 = vsyncadd [#allocation10], %s1073
      %s1076 = sshll.u32 [#allocation11], 4
      %s1077 = int_to_ptr.vmem [resolvable:$true] %s1076
      %1079 = dma.vmem_to_hbm [thread:$0]  %s1077, 16, %s8, [#allocation10]
    $region49: #{tpu_custom_call.1} parent=1 // pred_fallthru
      _
    // Predicated region
    $region50: #{tpu_custom_call.1} parent=1 // pred_check
      _
    $region51: #{tpu_custom_call.1} parent=1 // pred_check_branch
      %1081 = sbr.rel (0) target = $region53
    $region52: #{tpu_custom_call.1} parent=1 // pred_region
      %s1083 = ssub.s32 64, 64
      %1084 = vsyncadd [#allocation13], %s1083
      %s1086 = sshll.u32 [#allocation12], 4
      %s1087 = int_to_ptr.vmem [resolvable:$true] %s1086
      %1089 = dma.vmem_to_hbm [thread:$0]  %s1087, 64, %s9, [#allocation13]
    $region53: #{tpu_custom_call.1} parent=1 // pred_fallthru
      _
    // Predicated region
    $region54: #{tpu_custom_call.1} parent=1 // pred_check
      _
    $region55: #{tpu_custom_call.1} parent=1 // pred_check_branch
      %1091 = sbr.rel (0) target = $region57
    $region56: #{tpu_custom_call.1} parent=1 // pred_region
      %1092 = dma.done [#allocation4], 64
    $region57: #{tpu_custom_call.1} parent=1 // pred_fallthru
      _
    // Predicated region
    $region58: #{tpu_custom_call.1} parent=1 // pred_check
      _
    $region59: #{tpu_custom_call.1} parent=1 // pred_check_branch
      %1094 = sbr.rel (0) target = $region61
    $region60: #{tpu_custom_call.1} parent=1 // pred_region
      %1095 = dma.done [#allocation10], 16
    $region61: #{tpu_custom_call.1} parent=1 // pred_fallthru
      _
    // Predicated region
    $region62: #{tpu_custom_call.1} parent=1 // pred_check
      _
    $region63: #{tpu_custom_call.1} parent=1 // pred_check_branch
      %1097 = sbr.rel (0) target = $region65
    $region64: #{tpu_custom_call.1} parent=1 // pred_region
      %1098 = dma.done [#allocation10], 16
    $region65: #{tpu_custom_call.1} parent=1 // pred_fallthru
      _
    // Predicated region
    $region66: #{tpu_custom_call.1} parent=1 // pred_check
      _
    $region67: #{tpu_custom_call.1} parent=1 // pred_check_branch
      %1100 = sbr.rel (0) target = $region69
    $region68: #{tpu_custom_call.1} parent=1 // pred_region
      %1101 = dma.done [#allocation13], 64
    $region69: #{tpu_custom_call.1} parent=1 // pred_fallthru
      _
    %1102 = vsyncpa [#allocation3], 1
    %1103 = vsyncpa [#allocation6], 1
    %1104 = vsyncpa [#allocation4], 1
    %1105 = vsyncpa [#allocation10], 1
    %1106 = vsyncpa [#allocation13], 1

</llo_original>
